<compile_context>
chip_gen: v6e
topology: v6e:2x2x1
jax: 0.10.0
libtpu: 0.0.40
codegen_flags: <defaults>
</compile_context>

<pallas_src>
import functools
import math

import jax
import jax.numpy as jnp
from jax import lax
from jax.experimental import pallas as pl
from jax.experimental.pallas import tpu as pltpu


def _round_up(x, m):
    return ((x + m - 1) // m) * m


def _dice_kernel(p_ref, t_ref, loss_ref, num_acc, den_acc, *,
                 smooth, p_exp, true_l, block_l, lanes, need_mask):
    k = pl.program_id(1)                 # column (reduction) axis — last
    last = pl.num_programs(1) - 1
    nb = block_l // lanes                # number of lane-wide column slabs

    @pl.when(k == 0)
    def _():
        num_acc[...] = jnp.zeros_like(num_acc)
        den_acc[...] = jnp.zeros_like(den_acc)

    # bf16 stays bf16 (bf16-capable VPU/EUP on v6e/v7x); int/bool/f16 upcast
    # to f32.  v5e legalizes bf16 elementwise math internally.
    pred = p_ref[...]
    if pred.dtype != jnp.bfloat16:
        pred = pred.astype(jnp.float32)
    pred = jax.nn.sigmoid(pred)          # single EUP logistic op
    targ = t_ref[...]
    if targ.dtype != jnp.bfloat16:
        targ = targ.astype(jnp.float32)

    if p_exp == 2:
        pred_p = pred * pred
        targ_p = targ * targ
    elif float(p_exp).is_integer():
        pred_p = pred ** p_exp
        targ_p = targ ** p_exp
    else:
        pred_p = pred ** p_exp
        # TODO(synk): torch pow of a negative base with non-integer exponent
        # yields NaN; abs() keeps it finite here (intentional divergence).
        targ_p = jnp.abs(targ) ** p_exp

    num_term = pred * targ
    den_term = pred_p + targ_p

    def accumulate(nt, dt):
        # Lane-wise partials: plain VALU vreg adds over the block_l/lanes
        # column slabs; upcast to f32 only here.  No per-step XLU reduce and
        # no per-step narrow (tile_r, 1) read-modify-write on scratch.
        nt = nt.astype(jnp.float32)
        dt = dt.astype(jnp.float32)
        pn = nt[:, 0:lanes]
        pd = dt[:, 0:lanes]
        for j in range(1, nb):
            lo = j * lanes
            pn = pn + nt[:, lo:lo + lanes]
            pd = pd + dt[:, lo:lo + lanes]
        num_acc[...] += pn
        den_acc[...] += pd

    if need_mask:
        # Only the last column step can read past the true row length L, so
        # keep the masking work out of the steady-state step.
        @pl.when(k != last)
        def _():
            accumulate(num_term, den_term)

        @pl.when(k == last)
        def _():
            col = k * block_l + lax.broadcasted_iota(
                jnp.int32, num_term.shape, 1)
            valid = col < true_l
            accumulate(jnp.where(valid, num_term, 0.0),
                       jnp.where(valid, den_term, 0.0))
    else:
        accumulate(num_term, den_term)

    @pl.when(k == last)
    def _():
        num = jnp.sum(num_acc[...], axis=-1, keepdims=True)
        den = jnp.sum(den_acc[...], axis=-1, keepdims=True)
        loss_ref[...] = 1.0 - (num + smooth) / (den + smooth)


def binary_dice_loss(predict, target, *, smooth=1.0, p=2, reduction="mean",
                     block_l=2048, tile_r=512):
    assert predict.shape[0] == target.shape[0], \
        "predict & target batch size don't match"
    assert predict.shape == target.shape
    assert block_l % 128 == 0, "block_l must be a multiple of 128 (lane width)"
    assert tile_r % 8 == 0, "tile_r must be a multiple of 8 (sublane width)"

    N, C = int(predict.shape[0]), int(predict.shape[1])
    L = int(math.prod(predict.shape[2:]))
    R = N * C

    # Keep native dtypes (bf16/int/bool fine) — cast happens in-kernel.
    pred2 = predict.reshape(R, L)        # row-major, same as torch .view
    targ2 = target.reshape(R, L)

    # Column tiling: block dims must be 128-divisible OR the full extent.
    if L <= block_l:
        block_l_eff = L
        need_mask = False
    else:
        block_l_eff = block_l
        need_mask = (L % block_l_eff) != 0
    lanes = 128 if block_l_eff % 128 == 0 else block_l_eff

    # Row tiling: multiple of 8 (sublane) or the full extent.  When R fits in
    # one tile, still split into >= 2 row blocks (if R >= 16) so the
    # "parallel" axis feeds both v7x TensorCores.
    if R > tile_r:
        tile_r_eff = tile_r
    elif R >= 16:
        tile_r_eff = _round_up((R + 1) // 2, 8)
    else:
        tile_r_eff = R
    # TODO(synk): for tiny R (< 16) with huge L, a parallel split of the L
    # axis (per-split partial num/den combined in the wrapper) would engage
    # the second v7x TensorCore; not implemented here.

    grid = (pl.cdiv(R, tile_r_eff), pl.cdiv(L, block_l_eff))

    # Input tiles are double-buffered by the pipeline (2 inputs x 2 buffers);
    # add the f32 lane-accumulator scratch + headroom, stay well under v7x's
    # 64 MiB physical VMEM.
    itemsize_sum = pred2.dtype.itemsize + targ2.dtype.itemsize
    buf_bytes = 2 * tile_r_eff * block_l_eff * itemsize_sum
    scratch_bytes = 2 * tile_r_eff * lanes * 4
    vmem_limit = int(min(56 << 20,
                         max(16 << 20, buf_bytes + scratch_bytes + (4 << 20))))

    kernel = functools.partial(
        _dice_kernel, smooth=float(smooth), p_exp=p, true_l=L,
        block_l=block_l_eff, lanes=lanes, need_mask=need_mask)

    loss_rows = pl.pallas_call(
        kernel,
        out_shape=jax.ShapeDtypeStruct((R, 1), jnp.float32),
        grid_spec=pltpu.PrefetchScalarGridSpec(
            num_scalar_prefetch=0,
            grid=grid,
            in_specs=[
                pl.BlockSpec((tile_r_eff, block_l_eff), lambda r, k: (r, k)),
                pl.BlockSpec((tile_r_eff, block_l_eff), lambda r, k: (r, k)),
            ],
            out_specs=pl.BlockSpec((tile_r_eff, 1), lambda r, k: (r, 0)),
            scratch_shapes=[
                pltpu.VMEM((tile_r_eff, lanes), jnp.float32),
                pltpu.VMEM((tile_r_eff, lanes), jnp.float32),
            ],
        ),
        compiler_params=pltpu.CompilerParams(
            dimension_semantics=("parallel", "arbitrary"),
            vmem_limit_bytes=vmem_limit),
    )(pred2, targ2)

    loss = loss_rows[:, 0].reshape(N, C)

    if reduction == "mean":
        return jnp.mean(loss)
    elif reduction == "sum":
        return jnp.sum(loss)
    elif reduction == "none":
        return loss
    else:
        raise Exception("Unexpected reduction {}".format(reduction))


def _reference(predict, target, smooth=1.0, p=2, reduction="mean"):
    N, C = predict.shape[0], predict.shape[1]
    pr = jax.nn.sigmoid(predict.reshape(N, C, -1).astype(jnp.float32))
    tg = target.reshape(N, C, -1).astype(jnp.float32)
    num = jnp.sum(pr * tg, axis=-1) + smooth
    den = jnp.sum(pr ** p + tg ** p, axis=-1) + smooth
    loss = 1.0 - num / den
    if reduction == "mean":
        return jnp.mean(loss)
    elif reduction == "sum":
        return jnp.sum(loss)
    return loss


if __name__ == "__main__":
    key = jax.random.PRNGKey(0)
    k1, k2, k3, k4, k5, k6 = jax.random.split(key, 6)

    # Case 1: small NCHW, mean reduction (single column step, no masking).
    N, C, H, W = 2, 4, 16, 16
    predict = jax.random.normal(k1, (N, C, H, W), dtype=jnp.float32)
    target = (jax.random.uniform(k2, (N, C, H, W)) > 0.5).astype(jnp.float32)
    out = binary_dice_loss(predict, target, smooth=1.0, p=2, reduction="mean")
    out = jax.block_until_ready(out)
    ref = _reference(predict, target, smooth=1.0, p=2, reduction="mean")
    assert jnp.allclose(out, ref, atol=1e-5, rtol=1e-5), (out, ref)

    # Case 2: ragged spatial size (L=200, block_l=128) -> multi-step column
    # accumulation + last-step tail masking; 'none' reduction.
    H2, W2 = 10, 20
    predict2 = jax.random.normal(k3, (N, C, H2, W2), dtype=jnp.float32)
    target2 = (jax.random.uniform(k4, (N, C, H2, W2)) > 0.5).astype(jnp.float32)
    out2 = binary_dice_loss(predict2, target2, smooth=1.0, p=2,
                            reduction="none", block_l=128)
    out2 = jax.block_until_ready(out2)
    ref2 = _reference(predict2, target2, smooth=1.0, p=2, reduction="none")
    assert jnp.allclose(out2, ref2, atol=1e-5, rtol=1e-5), (out2, ref2)

    # Case 3: R = N*C = 32 >= 16 -> row axis split into 2 parallel blocks
    # (megacore path); bf16 inputs exercise the bf16 compute path.
    N3, C3, H3, W3 = 4, 8, 16, 16
    predict3 = jax.random.normal(k5, (N3, C3, H3, W3), dtype=jnp.bfloat16)
    target3 = (jax.random.uniform(k6, (N3, C3, H3, W3)) > 0.5).astype(
        jnp.bfloat16)
    out3 = binary_dice_loss(predict3, target3, smooth=1.0, p=2,
                            reduction="sum")
    out3 = jax.block_until_ready(out3)
    ref3 = _reference(predict3, target3, smooth=1.0, p=2, reduction="sum")
    assert jnp.allclose(out3, ref3, atol=5e-2, rtol=5e-2), (out3, ref3)

    print("KERNEL_OK")
</pallas_src>

<mosaic_0001>
module attributes {stable_mosaic.version = 11 : i64} {
  func.func @_dice_kernel(%arg0: i32, %arg1: i32, %arg2: memref<8x256xf32, #tpu.memory_space<vmem>>, %arg3: memref<8x256xf32, #tpu.memory_space<vmem>>, %arg4: memref<8x1xf32, #tpu.memory_space<vmem>>, %arg5: memref<8x128xf32, #tpu.memory_space<vmem>>, %arg6: memref<8x128xf32, #tpu.memory_space<vmem>>) attributes {dimension_semantics = [#tpu.dimension_semantics<parallel>, #tpu.dimension_semantics<arbitrary>], iteration_bounds = array<i64: 1, 1>, scalar_prefetch = 0 : i64, scratch_operands = 2 : i64, tpu.core_type = #tpu.core_type<tc>, window_params = [{transform_indices = @transform_0, window_bounds = array<i64: 8, 256>}, {transform_indices = @transform_1, window_bounds = array<i64: 8, 256>}, {transform_indices = @transform_2, window_bounds = array<i64: 8, 1>}]} {
    %c0_i32 = arith.constant 0 : i32
    %0 = arith.cmpi eq, %arg1, %c0_i32 : i32
    %1 = arith.extui %0 : i1 to i32
    %c0_i32_0 = arith.constant 0 : i32
    %2 = arith.cmpi ne, %1, %c0_i32_0 : i32
    scf.if %2 {
      %cst_14 = arith.constant 0.000000e+00 : f32
      %29 = vector.broadcast %cst_14 : f32 to vector<8x128xf32>
      %c0_15 = arith.constant 0 : index
      %c0_16 = arith.constant 0 : index
      %30 = vector.load %arg5[%c0_15, %c0_16] : memref<8x128xf32, #tpu.memory_space<vmem>>, vector<8x128xf32>
      tpu.vector_store %arg5[%c0_15, %c0_16], %29 {strides = array<i32>} : memref<8x128xf32, #tpu.memory_space<vmem>>, vector<8x128xf32>,
      %cst_17 = arith.constant 0.000000e+00 : f32
      %31 = vector.broadcast %cst_17 : f32 to vector<8x128xf32>
      %c0_18 = arith.constant 0 : index
      %c0_19 = arith.constant 0 : index
      %32 = vector.load %arg6[%c0_18, %c0_19] : memref<8x128xf32, #tpu.memory_space<vmem>>, vector<8x128xf32>
      tpu.vector_store %arg6[%c0_18, %c0_19], %31 {strides = array<i32>} : memref<8x128xf32, #tpu.memory_space<vmem>>, vector<8x128xf32>,
    } else {
    }
    %c0 = arith.constant 0 : index
    %c0_1 = arith.constant 0 : index
    %3 = vector.load %arg2[%c0, %c0_1] : memref<8x256xf32, #tpu.memory_space<vmem>>, vector<8x256xf32>
    %4 = arith.negf %3 : vector<8x256xf32>
    %5 = math.exp %4 : vector<8x256xf32>
    %cst = arith.constant 1.000000e+00 : f32
    %6 = vector.broadcast %cst : f32 to vector<8x256xf32>
    %7 = arith.addf %6, %5 : vector<8x256xf32>
    %8 = arith.divf %6, %7 : vector<8x256xf32>
    %c0_2 = arith.constant 0 : index
    %c0_3 = arith.constant 0 : index
    %9 = vector.load %arg3[%c0_2, %c0_3] : memref<8x256xf32, #tpu.memory_space<vmem>>, vector<8x256xf32>
    %10 = arith.mulf %8, %8 : vector<8x256xf32>
    %11 = arith.mulf %9, %9 : vector<8x256xf32>
    %12 = arith.mulf %8, %9 : vector<8x256xf32>
    %13 = arith.addf %10, %11 : vector<8x256xf32>
    %14 = vector.extract_strided_slice %12 {offsets = [0, 0], sizes = [8, 128], strides = [1, 1]} : vector<8x256xf32> to vector<8x128xf32>
    %15 = vector.extract_strided_slice %13 {offsets = [0, 0], sizes = [8, 128], strides = [1, 1]} : vector<8x256xf32> to vector<8x128xf32>
    %16 = vector.extract_strided_slice %12 {offsets = [0, 128], sizes = [8, 128], strides = [1, 1]} : vector<8x256xf32> to vector<8x128xf32>
    %17 = arith.addf %14, %16 : vector<8x128xf32>
    %18 = vector.extract_strided_slice %13 {offsets = [0, 128], sizes = [8, 128], strides = [1, 1]} : vector<8x256xf32> to vector<8x128xf32>
    %19 = arith.addf %15, %18 : vector<8x128xf32>
    %c0_4 = arith.constant 0 : index
    %c0_5 = arith.constant 0 : index
    %20 = vector.load %arg5[%c0_4, %c0_5] : memref<8x128xf32, #tpu.memory_space<vmem>>, vector<8x128xf32>
    %21 = arith.addf %20, %17 : vector<8x128xf32>
    %c0_6 = arith.constant 0 : index
    %c0_7 = arith.constant 0 : index
    %22 = vector.load %arg5[%c0_6, %c0_7] : memref<8x128xf32, #tpu.memory_space<vmem>>, vector<8x128xf32>
    tpu.vector_store %arg5[%c0_6, %c0_7], %21 {strides = array<i32>} : memref<8x128xf32, #tpu.memory_space<vmem>>, vector<8x128xf32>,
    %c0_8 = arith.constant 0 : index
    %c0_9 = arith.constant 0 : index
    %23 = vector.load %arg6[%c0_8, %c0_9] : memref<8x128xf32, #tpu.memory_space<vmem>>, vector<8x128xf32>
    %24 = arith.addf %23, %19 : vector<8x128xf32>
    %c0_10 = arith.constant 0 : index
    %c0_11 = arith.constant 0 : index
    %25 = vector.load %arg6[%c0_10, %c0_11] : memref<8x128xf32, #tpu.memory_space<vmem>>, vector<8x128xf32>
    tpu.vector_store %arg6[%c0_10, %c0_11], %24 {strides = array<i32>} : memref<8x128xf32, #tpu.memory_space<vmem>>, vector<8x128xf32>,
    %c0_i32_12 = arith.constant 0 : i32
    %26 = arith.cmpi eq, %arg1, %c0_i32_12 : i32
    %27 = arith.extui %26 : i1 to i32
    %c0_i32_13 = arith.constant 0 : i32
    %28 = arith.cmpi ne, %27, %c0_i32_13 : i32
    scf.if %28 {
      %c0_14 = arith.constant 0 : index
      %c0_15 = arith.constant 0 : index
      %29 = vector.load %arg5[%c0_14, %c0_15] : memref<8x128xf32, #tpu.memory_space<vmem>>, vector<8x128xf32>
      %cst_16 = arith.constant dense<0.000000e+00> : vector<8xf32>
      %30 = vector.multi_reduction <add>, %29, %cst_16 [1] : vector<8x128xf32> to vector<8xf32>
      %31 = vector.shape_cast %30 : vector<8xf32> to vector<8x1xf32>
      %c0_17 = arith.constant 0 : index
      %c0_18 = arith.constant 0 : index
      %32 = vector.load %arg6[%c0_17, %c0_18] : memref<8x128xf32, #tpu.memory_space<vmem>>, vector<8x128xf32>
      %cst_19 = arith.constant dense<0.000000e+00> : vector<8xf32>
      %33 = vector.multi_reduction <add>, %32, %cst_19 [1] : vector<8x128xf32> to vector<8xf32>
      %34 = vector.shape_cast %33 : vector<8xf32> to vector<8x1xf32>
      %cst_20 = arith.constant 1.000000e+00 : f32
      %35 = vector.broadcast %cst_20 : f32 to vector<8x1xf32>
      %36 = arith.addf %31, %35 : vector<8x1xf32>
      %cst_21 = arith.constant 1.000000e+00 : f32
      %37 = vector.broadcast %cst_21 : f32 to vector<8x1xf32>
      %38 = arith.addf %34, %37 : vector<8x1xf32>
      %39 = arith.divf %36, %38 : vector<8x1xf32>
      %cst_22 = arith.constant 1.000000e+00 : f32
      %40 = vector.broadcast %cst_22 : f32 to vector<8x1xf32>
      %41 = arith.subf %40, %39 : vector<8x1xf32>
      %c0_23 = arith.constant 0 : index
      %c0_24 = arith.constant 0 : index
      %42 = vector.load %arg4[%c0_23, %c0_24] : memref<8x1xf32, #tpu.memory_space<vmem>>, vector<8x1xf32>
      tpu.vector_store %arg4[%c0_23, %c0_24], %41 {strides = array<i32>} : memref<8x1xf32, #tpu.memory_space<vmem>>, vector<8x1xf32>,
    } else {
    }
    return
  }
  func.func @transform_0(%arg0: i32, %arg1: i32) -> (i32, i32) {
    %c0_i32 = arith.constant 0 : i32
    return %arg0, %arg1 : i32, i32
  }
  func.func @transform_1(%arg0: i32, %arg1: i32) -> (i32, i32) {
    %c0_i32 = arith.constant 0 : i32
    return %arg0, %arg1 : i32, i32
  }
  func.func @transform_2(%arg0: i32, %arg1: i32) -> (i32, i32) {
    %c0_i32 = arith.constant 0 : i32
    %c0_i32_0 = arith.constant 0 : i32
    return %arg0, %c0_i32 : i32, i32
  }
}

</mosaic_0001>

<llo_original>
// kernel: tpu_custom_call.1
$region0: #{tpu_custom_call.1}
  #allocation0 [shape = 'u32[]', space=smem, size = 0x4, offset = 0x4, fixed_abs, tag = 'smem constant byte address 0x4 - core index']
  #allocation1 [shape = 'u32[144,128]{1,0:T(1,128)}', space=vmem, size = 0x12000, scoped, tag = 'internal scratch']
  #allocation2 [shape = 'f32[8,128]{1,0:T(8,128)}', space=vmem, size = 0x1000, scoped, tag = 'scratch operand']
  #allocation3 [shape = 'f32[8,128]{1,0:T(8,128)}', space=vmem, size = 0x1000, scoped, tag = 'scratch operand']
  %s0 = inlined_call_operand.hbm [shape: f32[8,256], index: 0, kind: input, shape index: {}]
  %s1 = inlined_call_operand.hbm [shape: f32[8,256], index: 1, kind: input, shape index: {}]
  %s2 = inlined_call_operand.vmem [shape: f32[8,1], index: 2, kind: output, shape index: {}]
  %s3 = sld [smem:[#allocation0]]
  $region34: #{tpu_custom_call.1} parent=0
    _
  %s5 = ssub.s32 1, %s3
  %s6 = scalar_select 0, %s5, %s3
  $region1: #{tpu_custom_call.1} parent=0
    #allocation4 [shape = 'u8[8192]{0}', space=vmem, size = 0x2000, scoped, tag = 'input window, operand 0, single buffered']
    #allocation5 [shape = 's32[1]{0}', space=sflag, size = 0x4, scoped, tag = 'scoped memory for tpu_custom_call.1']
    #allocation6 [shape = 'u8[8192]{0}', space=vmem, size = 0x2000, scoped, tag = 'input window, operand 1, single buffered']
    #allocation7 [shape = 's32[1]{0}', space=sflag, size = 0x4, scoped, tag = 'scoped memory for tpu_custom_call.1']
    %7 = vsyncpa [#allocation5], 0
    %8 = vsyncpa [#allocation7], 0
    // Predicated region
    $region2: #{tpu_custom_call.1} parent=1 // pred_check
      _
    $region3: #{tpu_custom_call.1} parent=1 // pred_check_branch
      %10 = sbr.rel (0) target = $region5
    $region4: #{tpu_custom_call.1} parent=1 // pred_region
      %s12 = ssub.s32 256, 256
      %13 = vsyncadd [#allocation5], %s12
      %s15 = sshll.u32 [#allocation4], 4
      %s16 = int_to_ptr.vmem [resolvable:$true] %s15
      %18 = dma.hbm_to_vmem [thread:$0]  %s0, 256, %s16, [#allocation5]
    $region5: #{tpu_custom_call.1} parent=1 // pred_fallthru
      _
    // Predicated region
    $region6: #{tpu_custom_call.1} parent=1 // pred_check
      _
    $region7: #{tpu_custom_call.1} parent=1 // pred_check_branch
      %20 = sbr.rel (0) target = $region9
    $region8: #{tpu_custom_call.1} parent=1 // pred_region
      %s22 = ssub.s32 256, 256
      %23 = vsyncadd [#allocation7], %s22
      %s25 = sshll.u32 [#allocation6], 4
      %s26 = int_to_ptr.vmem [resolvable:$true] %s25
      %28 = dma.hbm_to_vmem [thread:$0]  %s1, 256, %s26, [#allocation7]
    $region9: #{tpu_custom_call.1} parent=1 // pred_fallthru
      _
    // Predicated region
    $region10: #{tpu_custom_call.1} parent=1 // pred_check
      _
    $region11: #{tpu_custom_call.1} parent=1 // pred_check_branch
      %30 = sbr.rel (0) target = $region13
    $region12: #{tpu_custom_call.1} parent=1 // pred_region
      %31 = dma.done [#allocation5], 256
    $region13: #{tpu_custom_call.1} parent=1 // pred_fallthru
      _
    // Predicated region
    $region14: #{tpu_custom_call.1} parent=1 // pred_check
      _
    $region15: #{tpu_custom_call.1} parent=1 // pred_check_branch
      %33 = sbr.rel (0) target = $region17
    $region16: #{tpu_custom_call.1} parent=1 // pred_region
      %34 = dma.done [#allocation7], 256
    $region17: #{tpu_custom_call.1} parent=1 // pred_fallthru
      _
    %p35 = scmp.eq.s32.totalorder 0, 0
    // Predicated region
    $region18: #{tpu_custom_call.1} parent=1 // pred_check
      %p36 = pneg %p35
    $region19: #{tpu_custom_call.1} parent=1 // pred_check_branch
      %38 = sbr.rel (%p36) target = $region21
    $region20: #{tpu_custom_call.1} parent=1 // pred_region
      %39 = vst [vmem:[#allocation2] sm:$0xff] 0.0
      %40 = vst [vmem:[#allocation3] sm:$0xff] 0.0
    $region21: #{tpu_custom_call.1} parent=1 // pred_fallthru
      _
    %v41 = vld [vmem:[#allocation4] sm:$0xff]
    %v42 = vld [vmem:[#allocation4 + $0x8] sm:$0xff]
    %v43 = vxor.u32 %v41, 2147483648
    %v44 = vxor.u32 %v42, 2147483648
    %v45 = vmul.f32 %v43, 1.442695
    %v46 = vpow.pop %v45
    %v47 = vmul.f32 %v44, 1.442695
    %v48 = vpow.pop %v47
    %v49 = vadd.f32 %v46, 1.0
    %v50 = vadd.f32 %v48, 1.0
    %v51 = vrcp.pop %v49
    %v52 = vmul.f32 1.0, %v51
    %v53 = vrcp.pop %v50
    %v54 = vmul.f32 1.0, %v53
    %v55 = vld [vmem:[#allocation6] sm:$0xff]
    %v56 = vld [vmem:[#allocation6 + $0x8] sm:$0xff]
    %v57 = vmul.f32 %v52, %v52
    %v58 = vmul.f32 %v54, %v54
    %v59 = vmul.f32 %v55, %v55
    %v60 = vmul.f32 %v56, %v56
    %v61 = vmul.f32 %v52, %v55
    %v62 = vmul.f32 %v54, %v56
    %v63 = vadd.f32 %v57, %v59
    %v64 = vadd.f32 %v58, %v60
    %v65 = vadd.f32 %v61, %v62
    %v66 = vadd.f32 %v63, %v64
    %v67 = vld [vmem:[#allocation2] sm:$0xff]
    %v68 = vadd.f32 %v67, %v65
    %69 = vst [vmem:[#allocation2] sm:$0xff] %v68
    %v70 = vld [vmem:[#allocation3] sm:$0xff]
    %v71 = vadd.f32 %v70, %v66
    %72 = vst [vmem:[#allocation3] sm:$0xff] %v71
    // Predicated region
    $region22: #{tpu_custom_call.1} parent=1 // pred_check
      %p73 = pneg %p35
    $region23: #{tpu_custom_call.1} parent=1 // pred_check_branch
      %75 = sbr.rel (%p73) target = $region25
    $region24: #{tpu_custom_call.1} parent=1 // pred_region
      %v76 = vld [vmem:[#allocation2] sm:$0xff]
      %77 = vadd.xlane.f32.xlu0 %v76
      %v78 = vpop.xlane.xlu0 %77
      %v79 = vld [vmem:[#allocation3] sm:$0xff]
      %80 = vadd.xlane.f32.xlu0 %v79
      %v81 = vpop.xlane.xlu0 %80
      %v82 = vadd.f32 %v78, 1.0
      %v83 = vadd.f32 %v81, 1.0
      %v84 = vrcp.pop %v83
      %v85 = vmul.f32 %v82, %v84
      %v86 = vsub.f32 1.0, %v85
      %vm87 = vcmask 7168
      %88 = vst.msk [vmem:[%s2] sm:$0xff] %vm87, %v86
    $region25: #{tpu_custom_call.1} parent=1 // pred_fallthru
      _
    // Predicated region
    $region26: #{tpu_custom_call.1} parent=1 // pred_check
      _
    $region27: #{tpu_custom_call.1} parent=1 // pred_check_branch
      %90 = sbr.rel (0) target = $region29
    $region28: #{tpu_custom_call.1} parent=1 // pred_region
      _
    $region29: #{tpu_custom_call.1} parent=1 // pred_fallthru
      _
    // Predicated region
    $region30: #{tpu_custom_call.1} parent=1 // pred_check
      _
    $region31: #{tpu_custom_call.1} parent=1 // pred_check_branch
      %92 = sbr.rel (0) target = $region33
    $region32: #{tpu_custom_call.1} parent=1 // pred_region
      _
    $region33: #{tpu_custom_call.1} parent=1 // pred_fallthru
      _
    %93 = vsyncpa [#allocation5], 1
    %94 = vsyncpa [#allocation7], 1

</llo_original>
